<compile_context>
chip_gen: v5e
topology: v5e:2x2
jax: 0.10.0
libtpu: 0.0.40
codegen_flags: <defaults>
</compile_context>

<pallas_src>
import math

import jax
import jax.numpy as jnp
from jax.experimental import pallas as pl
from jax.experimental.pallas import tpu as pltpu

# Deterministic stand-in for config['emb_reg'] (global config in the source repo).
EMB_REG = 1e-5

_LANE = 128
_MAX_TILE_ROWS = 4096  # 4096x128 f32 tile = 2 MiB / buffer; double-buffered 4 MiB.


def _round_up(a: int, b: int) -> int:
    return ((a + b - 1) // b) * b


def _fused_norm_kernel(seg_ref, x_ref, o_ref, acc_ref):
    """Segmented sum-of-squares over chunks of a concatenated slab.

    seg_ref : SMEM (num_chunks,) int32   -- embedding id of each chunk (prefetched)
    x_ref   : VMEM (TILE_ROWS, 128)      -- current chunk, native dtype
    o_ref   : VMEM (1, 1) f32            -- sum_e ||emb_e||_2, written on last step
    acc_ref : VMEM (num_emb, 128) f32    -- per-embedding per-lane partial sums
    """
    i = pl.program_id(0)

    @pl.when(i == 0)
    def _():
        acc_ref[...] = jnp.zeros_like(acc_ref)

    x = x_ref[...].astype(jnp.float32)
    # Per-lane partial sum for this chunk; cross-lane reduce deferred to epilogue.
    part = jnp.sum(x * x, axis=0, keepdims=True)  # (1, 128)

    seg = seg_ref[i]
    row_ids = jax.lax.broadcasted_iota(jnp.int32, acc_ref.shape, 0)
    acc_ref[...] = acc_ref[...] + jnp.where(row_ids == seg, part, 0.0)

    @pl.when(i == pl.num_programs(0) - 1)
    def _():
        per_emb = jnp.sum(acc_ref[...], axis=-1, keepdims=True)      # (num_emb, 1)
        o_ref[...] = jnp.sum(jnp.sqrt(per_emb), axis=0, keepdims=True)  # (1, 1)


def emb_loss(*embeddings, norm: int = 2, emb_reg: float = EMB_REG) -> jax.Array:
    """JAX/Pallas equivalent of EmbLoss.forward. Returns shape (1,) float32."""
    assert norm == 2, "only p=2 (the module default) is implemented"
    assert len(embeddings) >= 1
    num_emb = len(embeddings)

    # Keep the embeddings' native (common) dtype in HBM; upcast happens in-kernel.
    dtype = jnp.result_type(*embeddings)
    if not jnp.issubdtype(dtype, jnp.floating):
        dtype = jnp.float32
    itemsize = jnp.dtype(dtype).itemsize
    sub_mult = max(8, 32 // itemsize)  # sublane packing: f32->8, bf16->16, int8->32

    sizes = [int(math.prod(e.shape)) for e in embeddings]
    max_rows = max(max((-(-n // _LANE) for n in sizes), default=1), 1)
    tile_rows = min(_MAX_TILE_ROWS, _round_up(max_rows, sub_mult))
    chunk_elems = tile_rows * _LANE

    # Build one slab: each embedding padded to whole chunks so chunks never
    # straddle embeddings (zero padding does not change the L2 norm).
    pieces = []
    seg_ids = []
    for e_idx, (emb, n) in enumerate(zip(embeddings, sizes)):
        n_chunks = max(1, -(-n // chunk_elems))
        flat = jnp.ravel(emb).astype(dtype)
        flat = jnp.pad(flat, (0, n_chunks * chunk_elems - n))
        pieces.append(flat.reshape(n_chunks * tile_rows, _LANE))
        seg_ids.extend([e_idx] * n_chunks)
    slab = jnp.concatenate(pieces, axis=0) if len(pieces) > 1 else pieces[0]
    seg_table = jnp.asarray(seg_ids, dtype=jnp.int32)
    total_chunks = len(seg_ids)
    total_elems = total_chunks * chunk_elems

    cost = pl.CostEstimate(
        flops=2 * total_elems,
        transcendentals=num_emb,
        bytes_accessed=total_elems * itemsize + 4,
    )

    out = pl.pallas_call(
        _fused_norm_kernel,
        out_shape=jax.ShapeDtypeStruct((1, 1), jnp.float32),
        grid_spec=pltpu.PrefetchScalarGridSpec(
            num_scalar_prefetch=1,
            grid=(total_chunks,),
            in_specs=[pl.BlockSpec((tile_rows, _LANE), lambda i, seg_ref: (i, 0))],
            out_specs=pl.BlockSpec((1, 1), lambda i, seg_ref: (0, 0)),
            scratch_shapes=[pltpu.VMEM((num_emb, _LANE), jnp.float32)],
        ),
        compiler_params=pltpu.CompilerParams(
            dimension_semantics=("arbitrary",),
        ),
        cost_estimate=cost,
    )(seg_table, slab)

    total = out[0, 0] / jnp.float32(embeddings[-1].shape[0])
    return (total * jnp.float32(emb_reg)).reshape(1)


def _reference(*embeddings, emb_reg: float = EMB_REG) -> jax.Array:
    total = jnp.zeros((), jnp.float32)
    for emb in embeddings:
        total = total + jnp.sqrt(jnp.sum(jnp.square(emb.astype(jnp.float32))))
    total = total / jnp.float32(embeddings[-1].shape[0])
    return (total * jnp.float32(emb_reg)).reshape(1)


if __name__ == "__main__":
    key = jax.random.PRNGKey(0)
    k1, k2 = jax.random.split(key)
    # Small embedding matrices (batch, hidden), as the loss is typically fed
    # user / item embedding tables.
    user_emb = jax.random.normal(k1, (8, 32), dtype=jnp.float32)
    item_emb = jax.random.normal(k2, (16, 32), dtype=jnp.float32)

    loss_fn = jax.jit(emb_loss)
    out = loss_fn(user_emb, item_emb)
    out = jax.block_until_ready(out)

    ref = _reference(user_emb, item_emb)
    assert out.shape == (1,)
    assert jnp.allclose(out, ref, rtol=1e-5, atol=1e-8), (out, ref)

    print("KERNEL_OK")
</pallas_src>

<mosaic_0001>
module attributes {stable_mosaic.version = 11 : i64} {
  func.func @_fused_norm_kernel(%arg0: i32, %arg1: memref<2xi32, #tpu.memory_space<smem>>, %arg2: memref<8x128xf32, #tpu.memory_space<vmem>>, %arg3: memref<1x1xf32, #tpu.memory_space<vmem>>, %arg4: memref<2x128xf32, #tpu.memory_space<vmem>>) attributes {dimension_semantics = [#tpu.dimension_semantics<arbitrary>], iteration_bounds = array<i64: 2>, scalar_prefetch = 1 : i64, scratch_operands = 1 : i64, tpu.core_type = #tpu.core_type<tc>, window_params = [{transform_indices = @transform_0, window_bounds = array<i64: 8, 128>}, {pipeline_mode = #tpu.pipeline_mode<synchronous>, transform_indices = @transform_1, window_bounds = array<i64: 1, 1>}]} {
    %c0_i32 = arith.constant 0 : i32
    %0 = arith.cmpi eq, %arg0, %c0_i32 : i32
    %1 = arith.extui %0 : i1 to i32
    %c0_i32_0 = arith.constant 0 : i32
    %2 = arith.cmpi ne, %1, %c0_i32_0 : i32
    scf.if %2 {
      %cst_8 = arith.constant 0.000000e+00 : f32
      %22 = vector.broadcast %cst_8 : f32 to vector<2x128xf32>
      %c0_9 = arith.constant 0 : index
      %c0_10 = arith.constant 0 : index
      %23 = vector.load %arg4[%c0_9, %c0_10] : memref<2x128xf32, #tpu.memory_space<vmem>>, vector<2x128xf32>
      tpu.vector_store %arg4[%c0_9, %c0_10], %22 {strides = array<i32>} : memref<2x128xf32, #tpu.memory_space<vmem>>, vector<2x128xf32>,
    } else {
    }
    %c0 = arith.constant 0 : index
    %c0_1 = arith.constant 0 : index
    %3 = vector.load %arg2[%c0, %c0_1] : memref<8x128xf32, #tpu.memory_space<vmem>>, vector<8x128xf32>
    %4 = arith.mulf %3, %3 : vector<8x128xf32>
    %cst = arith.constant dense<0.000000e+00> : vector<128xf32>
    %5 = vector.multi_reduction <add>, %4, %cst [0] : vector<8x128xf32> to vector<128xf32>
    %6 = vector.shape_cast %5 : vector<128xf32> to vector<1x128xf32>
    %7 = arith.index_cast %arg0 : i32 to index
    %8 = memref.load %arg1[%7] : memref<2xi32, #tpu.memory_space<smem>>
    %9 = tpu.iota {dimensions = array<i32: 0>} : vector<2x128xi32>
    %c0_2 = arith.constant 0 : index
    %c0_3 = arith.constant 0 : index
    %10 = vector.load %arg4[%c0_2, %c0_3] : memref<2x128xf32, #tpu.memory_space<vmem>>, vector<2x128xf32>
    %11 = vector.broadcast %8 : i32 to vector<2x128xi32>
    %12 = arith.cmpi eq, %9, %11 : vector<2x128xi32>
    %cst_4 = arith.constant 0.000000e+00 : f32
    %13 = vector.shape_cast %6 : vector<1x128xf32> to vector<1x128xf32>
    %14 = vector.broadcast %13 : vector<1x128xf32> to vector<2x128xf32>
    %15 = vector.broadcast %cst_4 : f32 to vector<2x128xf32>
    %16 = arith.select %12, %14, %15 : vector<2x128xi1>, vector<2x128xf32>
    %17 = arith.addf %10, %16 : vector<2x128xf32>
    %c0_5 = arith.constant 0 : index
    %c0_6 = arith.constant 0 : index
    %18 = vector.load %arg4[%c0_5, %c0_6] : memref<2x128xf32, #tpu.memory_space<vmem>>, vector<2x128xf32>
    tpu.vector_store %arg4[%c0_5, %c0_6], %17 {strides = array<i32>} : memref<2x128xf32, #tpu.memory_space<vmem>>, vector<2x128xf32>,
    %c1_i32 = arith.constant 1 : i32
    %19 = arith.cmpi eq, %arg0, %c1_i32 : i32
    %20 = arith.extui %19 : i1 to i32
    %c0_i32_7 = arith.constant 0 : i32
    %21 = arith.cmpi ne, %20, %c0_i32_7 : i32
    scf.if %21 {
      %c0_8 = arith.constant 0 : index
      %c0_9 = arith.constant 0 : index
      %22 = vector.load %arg4[%c0_8, %c0_9] : memref<2x128xf32, #tpu.memory_space<vmem>>, vector<2x128xf32>
      %cst_10 = arith.constant dense<0.000000e+00> : vector<2xf32>
      %23 = vector.multi_reduction <add>, %22, %cst_10 [1] : vector<2x128xf32> to vector<2xf32>
      %24 = vector.shape_cast %23 : vector<2xf32> to vector<2x1xf32>
      %25 = math.sqrt %24 : vector<2x1xf32>
      %cst_11 = arith.constant dense<0.000000e+00> : vector<1xf32>
      %26 = vector.multi_reduction <add>, %25, %cst_11 [0] : vector<2x1xf32> to vector<1xf32>
      %27 = vector.shape_cast %26 : vector<1xf32> to vector<1x1xf32>
      %c0_12 = arith.constant 0 : index
      %c0_13 = arith.constant 0 : index
      %28 = vector.load %arg3[%c0_12, %c0_13] : memref<1x1xf32, #tpu.memory_space<vmem>>, vector<1x1xf32>
      tpu.vector_store %arg3[%c0_12, %c0_13], %27 {strides = array<i32>} : memref<1x1xf32, #tpu.memory_space<vmem>>, vector<1x1xf32>,
    } else {
    }
    return
  }
  func.func @transform_0(%arg0: i32, %arg1: memref<2xi32, #tpu.memory_space<smem>>) -> (i32, i32) {
    %c0_i32 = arith.constant 0 : i32
    %c0_i32_0 = arith.constant 0 : i32
    return %arg0, %c0_i32 : i32, i32
  }
  func.func @transform_1(%arg0: i32, %arg1: memref<2xi32, #tpu.memory_space<smem>>) -> (i32, i32) {
    %c0_i32 = arith.constant 0 : i32
    %c0_i32_0 = arith.constant 0 : i32
    %c0_i32_1 = arith.constant 0 : i32
    return %c0_i32, %c0_i32_0 : i32, i32
  }
}

</mosaic_0001>

<llo_original>
// kernel: emb_loss.1
$region0: #{emb_loss.1}
  #allocation0 [shape = 'u32[]', space=smem, size = 0x4, offset = 0x4, fixed_abs, tag = 'smem constant byte address 0x4 - core index']
  #allocation1 [shape = 'u32[72,128]{1,0:T(1,128)}', space=vmem, size = 0x9000, scoped, tag = 'internal scratch']
  #allocation2 [shape = 'f32[2,128]{1,0:T(2,128)}', space=vmem, size = 0x400, scoped, tag = 'scratch operand']
  #allocation3 [shape = 's32[1]{0}', space=sflag, size = 0x4, scoped, tag = 'scoped memory for emb_loss.1']
  #allocation4 [shape = 'u8[512]{0}', space=smem, size = 0x200, scoped, tag = 'prefetched SMEM operand 0']
  %s0 = inlined_call_operand.vmem [shape: s32[2], index: 0, kind: input, shape index: {}]
  %s1 = inlined_call_operand.vmem [shape: f32[16,128], index: 1, kind: input, shape index: {}]
  %s2 = inlined_call_operand.hbm [shape: f32[1,1], index: 2, kind: output, shape index: {}]
  %s3 = sld [smem:[#allocation0]]
  $region45: #{emb_loss.1} parent=0
    _
  %s5 = ssub.s32 1, %s3
  %s6 = scalar_select 0, %s5, %s3
  %s8 = sshll.u32 %s0, 4
  %s9 = int_to_ptr.vmem [resolvable:$true] %s8
  %11 = dma.vmem_to_smem %s9, 16, [#allocation4], [#allocation3]
  %13 = dma.done [#allocation3], 16
  %14 = sfence
  $region1: #{emb_loss.1} parent=0
    #allocation5 [shape = 'u8[512]{0}', space=vmem, size = 0x400, scoped, tag = 'output window, operand 0, single buffered']
    #allocation6 [shape = 's32[2]{0}', space=sflag, size = 0x8, scoped, tag = 'scoped memory for emb_loss.1']
    %15 = vsyncpa [#allocation6], 0
    loop: start=0, step=1, limit=4
    $region2: #{emb_loss.1} parent=1 // loop_pre_header
      _
    $region3: #{emb_loss.1} parent=1 // loop_header
      %s17 = sphi 0, %s21
      %p18 = scmp.ge.s32.totalorder %s17, 4
      %s27 = sphi 0, %s29
      %s30 = sphi 0, %s27
      %s31 = sphi 0, %s30
      %s47 = sphi 0, %s31
      %s51 = sphi 0, %s51
      %s53 = sphi 0, %s51
      %s54 = sphi 0, %s53
      %s68 = sphi 0, %s54
    $region4: #{emb_loss.1} parent=1 // loop_header_branch
      %20 = sbr.rel (%p18) target = $region8
    $region5: #{emb_loss.1} parent=1 // loop_body
      %s22 = ssub.s32 %s17, 1
      %s23 = ssub.s32 %s17, 2
      %s24 = sadd.s32 %s17, 1
      %s25 = ssub.s32 %s17, %s24
      %p26 = scmp.eq.s32.totalorder %s25, 0
      %s28 = sadd.s32 %s27, 1
      %s29 = scalar_select %p26, %s27, %s28
      %p32 = pneg %p26
      %p33 = scmp.eq.s32.totalorder %s17, 1
      %p34 = por %p32, %p33
      %p35 = scmp.ne.s32.totalorder %s27, %s30
      %p36 = scmp.eq.s32.totalorder %s17, 0
      %p37 = por %p35, %p36
      %p38 = scmp.ne.s32.totalorder %s27, %s30
      %p39 = scmp.eq.s32.totalorder %s22, 1
      %p40 = por %p38, %p39
      %p41 = scmp.ne.s32.totalorder %s30, %s31
      %p42 = scmp.eq.s32.totalorder %s22, 0
      %p43 = por %p41, %p42
      %p44 = scmp.ne.s32.totalorder %s30, %s31
      %p45 = scmp.eq.s32.totalorder %s23, 1
      %p46 = por %p44, %p45
      %p48 = scmp.ne.s32.totalorder %s31, %s47
      %p49 = scmp.eq.s32.totalorder %s23, 0
      %p50 = por %p48, %p49
      %s52 = sadd.s32 %s51, 1
      %p55 = scmp.eq.s32.totalorder %s17, 1
      %p56 = scmp.ne.s32.totalorder %s51, %s53
      %p57 = scmp.eq.s32.totalorder %s17, 0
      %p58 = por %p56, %p57
      %p59 = scmp.ne.s32.totalorder %s51, %s53
      %p60 = scmp.eq.s32.totalorder %s22, 1
      %p61 = por %p59, %p60
      %p62 = scmp.ne.s32.totalorder %s53, %s54
      %p63 = scmp.eq.s32.totalorder %s22, 0
      %p64 = por %p62, %p63
      %p65 = scmp.ne.s32.totalorder %s53, %s54
      %p66 = scmp.eq.s32.totalorder %s23, 1
      %p67 = por %p65, %p66
      %p69 = scmp.ne.s32.totalorder %s54, %s68
      %p70 = scmp.eq.s32.totalorder %s23, 0
      %p71 = por %p69, %p70
      %p72 = scmp.le.s32.totalorder 1, %s17
      %p73 = scmp.lt.s32.totalorder %s17, 3
      %p74 = pnand %p72, %p73
      %p75 = pneg %p74
      // Predicated region
      $region9: #{emb_loss.1} parent=5 // pred_check
        _
      $region10: #{emb_loss.1} parent=5 // pred_check_branch
        %77 = sbr.rel (%p74) target = $region12
      $region11: #{emb_loss.1} parent=5 // pred_region
        %s78 = ssub.s32 %s17, 1
      $region12: #{emb_loss.1} parent=5 // pred_fallthru
        _
      %p79 = scmp.lt.s32.totalorder %s17, 2
      // Predicated region
      $region13: #{emb_loss.1} parent=5 // pred_check
        %p80 = pneg %p79
      $region14: #{emb_loss.1} parent=5 // pred_check_branch
        %82 = sbr.rel (%p80) target = $region16
      $region15: #{emb_loss.1} parent=5 // pred_region
        // Predicated region
        $region17: #{emb_loss.1} parent=15 // pred_check
          %p83 = pneg %p37
        $region18: #{emb_loss.1} parent=15 // pred_check_branch
          %85 = sbr.rel (%p83) target = $region20
        $region19: #{emb_loss.1} parent=15 // pred_region
          %p86 = scmp.lt.s32.totalorder %s17, 1
          %s87 = scalar_select %p86, %s17, 1
          %s88 = smul.addr %s87, 8
          %s89 = scalar_lea.vmem %s1, %s88
        $region20: #{emb_loss.1} parent=15 // pred_fallthru
          _
      $region16: #{emb_loss.1} parent=5 // pred_fallthru
        _
      %p90 = scmp.le.s32.totalorder 1, %s17
      %p91 = scmp.lt.s32.totalorder %s17, 3
      %p92 = pnand %p90, %p91
      %p93 = pneg %p92
      // Predicated region
      $region21: #{emb_loss.1} parent=5 // pred_check
        _
      $region22: #{emb_loss.1} parent=5 // pred_check_branch
        %95 = sbr.rel (%p92) target = $region24
      $region23: #{emb_loss.1} parent=5 // pred_region
        %s96 = ssub.s32 %s17, 1
        %p97 = scmp.lt.s32.totalorder %s22, 1
        %s98 = scalar_select %p97, %s22, 1
        %s99 = smul.addr %s98, 8
        %s100 = scalar_lea.vmem %s1, %s99
        %p101 = pneg %p43
        %p102 = pneg %p40
        %p103 = pneg %p64
        %p104 = pneg %p61
        %p105 = scmp.lt.s32.totalorder %s22, 1
        %s106 = scalar_select %p105, %s22, 1
        %s107 = smul.addr %s106, 8
        %s108 = scalar_lea.vmem %s1, %s107
        %p109 = scmp.eq.s32.totalorder %s22, 0
        // Predicated region
        $region25: #{emb_loss.1} parent=23 // pred_check
          %p110 = pneg %p109
        $region26: #{emb_loss.1} parent=23 // pred_check_branch
          %112 = sbr.rel (%p110) target = $region28
        $region27: #{emb_loss.1} parent=23 // pred_region
          %113 = vst [vmem:[#allocation2] sm:$0x3] 0.0
        $region28: #{emb_loss.1} parent=23 // pred_fallthru
          _
        %v114 = vld [vmem:[%s108] sm:$0xff]
        %v115 = vmul.f32 %v114, %v114
        %v116 = vrot.slane %v115, 4
        %v117 = vadd.f32 %v115, %v116
        %v118 = vrot.slane %v117, 2
        %v119 = vadd.f32 %v117, %v118
        %v120 = vrot.slane %v119, 1
        %v121 = vadd.f32 %v119, %v120
        %s122 = sld [smem:[#allocation4 + %s22]]
        %v123 = vlaneseq
        %v124 = vshrl.u32 %v123, 7
        %v125 = vld [vmem:[#allocation2] sm:$0x3]
        %v126 = vstv %s122
        %vm127 = vcmp.eq.s32.totalorder %v124, %v126
        %v128 = vsel %vm127, %v121, 0.0
        %v129 = vadd.f32 %v125, %v128
        %130 = vst [vmem:[#allocation2] sm:$0x3] %v129
        %p131 = scmp.eq.s32.totalorder %s22, 1
        // Predicated region
        $region29: #{emb_loss.1} parent=23 // pred_check
          %p132 = pneg %p131
        $region30: #{emb_loss.1} parent=23 // pred_check_branch
          %134 = sbr.rel (%p132) target = $region32
        $region31: #{emb_loss.1} parent=23 // pred_region
          %v135 = vld [vmem:[#allocation2] sm:$0x3]
          %vm136 = vcmask 1041408
          %v137 = vsel %vm136, %v135, 0.0
          %138 = vadd.xlane.f32.xlu0 %v137
          %v139 = vpop.xlane.xlu0 %138
          %v140 = vrsqrt.pop %v139
          %v141 = vmul.f32 %v140, %v139
          %v142 = vmul.f32 %v141, %v140
          %v143 = vmul.f32 0.5, %v142
          %v144 = vsub.f32 1.5, %v143
          %v145 = vmul.f32 %v140, %v144
          %v146 = vmul.f32 %v139, %v145
          %vm147 = vcmp.eq.f32.partialorder %v139, inf
          %v148 = vsel %vm147, %v139, %v146
          %vm149 = vcmp.eq.f32.partialorder %v139, 0.0
          %v150 = vand.u32 %v139, 2147483648
          %v151 = vsel %vm149, %v150, %v148
          %v152 = vsel %vm136, %v151, 0.0
          %v153 = vrot.slane %v152, 4
          %v154 = vadd.f32 %v152, %v153
          %v155 = vrot.slane %v154, 2
          %v156 = vadd.f32 %v154, %v155
          %v157 = vrot.slane %v156, 1
          %v158 = vadd.f32 %v156, %v157
          %vm159 = vcmask 0
          %160 = vst.msk [vmem:[#allocation5] sm:$0x1] %vm159, %v158
        $region32: #{emb_loss.1} parent=23 // pred_fallthru
          _
        // Predicated region
        $region33: #{emb_loss.1} parent=23 // pred_check
          %p161 = pneg %p61
        $region34: #{emb_loss.1} parent=23 // pred_check_branch
          %163 = sbr.rel (%p161) target = $region36
        $region35: #{emb_loss.1} parent=23 // pred_region
          %165 = vsyncadd [#allocation6], 0
          %s167 = sshll.u32 [#allocation5], 4
          %s168 = int_to_ptr.vmem [resolvable:$true] %s167
          %s169 = sshll.u32 %s2, 4
          %s170 = int_to_ptr.hbm [resolvable:$true] %s169
          %172 = dma.vmem_to_hbm [thread:$0]  %s168, 16, %s170, [#allocation6]
        $region36: #{emb_loss.1} parent=23 // pred_fallthru
          _
        // Predicated region
        $region37: #{emb_loss.1} parent=23 // pred_check
          %p173 = pneg %p61
        $region38: #{emb_loss.1} parent=23 // pred_check_branch
          %175 = sbr.rel (%p173) target = $region40
        $region39: #{emb_loss.1} parent=23 // pred_region
          %177 = dma.done [#allocation6], 16
        $region40: #{emb_loss.1} parent=23 // pred_fallthru
          _
      $region24: #{emb_loss.1} parent=5 // pred_fallthru
        _
      %p178 = scmp.le.s32.totalorder 2, %s17
      // Predicated region
      $region41: #{emb_loss.1} parent=5 // pred_check
        %p179 = pneg %p178
      $region42: #{emb_loss.1} parent=5 // pred_check_branch
        %181 = sbr.rel (%p179) target = $region44
      $region43: #{emb_loss.1} parent=5 // pred_region
        %s182 = ssub.s32 %s17, 2
      $region44: #{emb_loss.1} parent=5 // pred_fallthru
        _
    $region6: #{emb_loss.1} parent=1 // loop_footer
      %s21 = sadd.s32 1, %s17
    $region7: #{emb_loss.1} parent=1 // loop_footer_branch
      %16 = sbr.rel target = $region3
    $region8: #{emb_loss.1} parent=1 // loop_exit
      _
    %183 = vsyncpa [#allocation6], 1
    %s184 = scalar_lea.sflag [#allocation6], 1
    %185 = vsyncpa %s184, 1

</llo_original>
